<compile_context>
chip_gen: v7x
topology: tpu7x:2x2x1
jax: 0.10.0
libtpu: 0.0.40
codegen_flags: <defaults>
</compile_context>

<pallas_src>
import functools

import jax
import jax.numpy as jnp
from jax import lax
from jax.experimental import pallas as pl
from jax.experimental.pallas import tpu as pltpu


def policy_kernel(doc_ref, mean_ref,
                  w1_ref, b1_ref, w2_ref, b2_ref,
                  wmulv_ref, bmulv_ref, cons_ref,
                  wd_ref, loss_ref, *, valid_v):
    Bt = doc_ref.shape[0]
    Vp = wd_ref.shape[1]          # lane-aligned (possibly padded) vocab size

    # merge_fn + row-sum normalize (EUP reciprocal + multiply instead of divide)
    x = 0.5 * (doc_ref[...] + mean_ref[...])                          # [Bt, E] f32
    inv_rowsum = pl.reciprocal(jnp.sum(x, axis=1, keepdims=True), approx=True)
    x_norm = (x * inv_rowsum).astype(jnp.bfloat16)

    # encoder: Linear -> ReLU -> Linear -> ReLU (dropout = 0); bf16 MXU, f32 acc
    h1 = jnp.dot(x_norm, w1_ref[...], preferred_element_type=jnp.float32) + b1_ref[...]
    h1 = jnp.maximum(h1, 0.0).astype(jnp.bfloat16)                    # [Bt, H]
    h2 = jnp.dot(h1, w2_ref[...], preferred_element_type=jnp.float32) + b2_ref[...]
    h2 = jnp.maximum(h2, 0.0).astype(jnp.bfloat16)                    # [Bt, H]

    # fused fc1|fc2: one [Bt,H] x [H,2*Vp] matmul; Vp is a multiple of 128 so
    # the mu / logvar split is a zero-cost lane-tile view.
    mulv = jnp.dot(h2, wmulv_ref[...], preferred_element_type=jnp.float32) \
        + bmulv_ref[...]                                              # [Bt, 2*Vp]
    mu = mulv[:, :Vp]
    logvar = mulv[:, Vp:]

    # eval-mode reparameterize: z = mu ; wd = softmax(z, dim=1) over real lanes
    z_max = jnp.max(mu, axis=1, keepdims=True)
    e = jnp.exp(mu - z_max)
    if Vp != valid_v:  # static branch, only emitted when vocab needed padding
        col_v = lax.broadcasted_iota(jnp.int32, (Bt, Vp), 1)
        e = jnp.where(col_v < valid_v, e, 0.0)
    inv_den = pl.reciprocal(jnp.sum(e, axis=1, keepdims=True), approx=True)
    wd = e * inv_den                                                  # [Bt, Vp]
    wd_ref[...] = wd

    # reconstruction + per-row loss pieces (batch-mean MSE finished outside)
    recon = jnp.dot(wd.astype(jnp.bfloat16), cons_ref[...],
                    preferred_element_type=jnp.float32)               # [Bt, E]
    diff = x - recon
    sq = jnp.sum(diff * diff, axis=1, keepdims=True)                  # [Bt, 1]
    # pad lanes contribute exactly 0 to KLD: mu_pad = logvar_pad = 0
    # -> -0.5 * (1 + 0 - 0 - exp(0)) = 0
    kld = -0.5 * jnp.sum(1.0 + logvar - mu * mu - jnp.exp(logvar),
                         axis=1, keepdims=True)                       # [Bt, 1]

    # single lane-dense (Bt, 128) loss block: col 0 = sq-err sum, col 1 = KLD
    col = lax.broadcasted_iota(jnp.int32, (Bt, 128), 1)
    loss_ref[...] = jnp.where(col == 0, sq, jnp.where(col == 1, kld, 0.0))


def _pick_block_b(B):
    # Small batches: single grid step. Large batches: fill the MXU M-dim
    # (256 for v6e/v7x, 128 as the v5e floor) and give v7x megacore several
    # grid steps per core so the duplicated weight DMA amortizes.
    if B <= 256:
        return B
    for cand in (256, 128):
        if B % cand == 0:
            return cand
    for cand in range(256, 7, -8):
        if B % cand == 0:
            return cand
    return B


def _vmem_limit_bytes(block_b, E, H, Vp):
    bf16, f32 = 2, 4
    # weights: single-buffered (pl.Buffered(1) on their specs), resident
    weights = (E * H + H * H + H * 2 * Vp + Vp * E) * bf16 + (2 * H + 2 * Vp) * f32
    # streamed batch-tile operands: double-buffered by the pipeline
    streamed = 2 * (2 * block_b * E * f32) + 2 * (block_b * Vp + block_b * 128) * f32
    live = block_b * (2 * E + 2 * H + 6 * Vp) * f32      # live intermediates (rough)
    total = weights + streamed + live
    try:
        cap = int(0.8 * pltpu.get_tpu_info().vmem_capacity_bytes)  # v7x: 64 MiB phys
    except Exception:
        cap = 64 * 1024 * 1024                                      # safe on all gens
    return int(min(cap, max(2 * total, 8 * 1024 * 1024)))


def policy_forward(doc_embed, mean_embed, params, *, block_b=None):
    B, E = doc_embed.shape
    H = params["w1"].shape[1]
    V = params["wmu"].shape[1]
    Vp = ((V + 127) // 128) * 128          # lane-aligned vocab

    if block_b is None:
        block_b = _pick_block_b(B)
    block_b = min(block_b, B)
    assert B % block_b == 0, "batch must be divisible by block_b"
    num_tiles = B // block_b

    def pad_cols(a, width):
        if a.shape[1] == width:
            return a
        return jnp.pad(a, ((0, 0), (0, width - a.shape[1])))

    # weight packing: bf16 MXU operands; fused + lane-padded mu|logvar projection
    w1 = params["w1"].astype(jnp.bfloat16)
    w2 = params["w2"].astype(jnp.bfloat16)
    b1 = params["b1"].astype(jnp.float32)
    b2 = params["b2"].astype(jnp.float32)
    w_mulv = jnp.concatenate([pad_cols(params["wmu"], Vp),
                              pad_cols(params["wlv"], Vp)],
                             axis=1).astype(jnp.bfloat16)
    b_mulv = jnp.concatenate([pad_cols(params["bmu"], Vp),
                              pad_cols(params["blv"], Vp)],
                             axis=1).astype(jnp.float32)
    cons = params["construct"]
    if Vp != V:
        cons = jnp.pad(cons, ((0, Vp - V), (0, 0)))
    cons = cons.astype(jnp.bfloat16)

    def batch_spec(bs):
        return pl.BlockSpec(bs, lambda i: (i, 0))

    def resident_spec(bs):
        # Constant block index: DMA'd once, stays resident; single-buffered so
        # weight VMEM isn't doubled by the default 2-deep pipelining.
        return pl.BlockSpec(bs, lambda i: (0, 0), pipeline_mode=pl.Buffered(1))

    flops = 2 * B * (E * H + H * H + 2 * H * Vp + Vp * E) + 12 * B * (E + Vp)
    transcendentals = B * (2 * Vp + 2)
    bytes_accessed = (2 * B * E * 4
                      + (E * H + H * H + 2 * H * Vp + Vp * E) * 2
                      + (2 * H + 2 * Vp) * 4
                      + B * Vp * 4 + B * 128 * 4)

    wd_full, loss_parts = pl.pallas_call(
        functools.partial(policy_kernel, valid_v=V),
        out_shape=(
            jax.ShapeDtypeStruct((B, Vp), jnp.float32),
            jax.ShapeDtypeStruct((B, 128), jnp.float32),
        ),
        grid_spec=pltpu.PrefetchScalarGridSpec(
            num_scalar_prefetch=0,
            grid=(num_tiles,),
            in_specs=[
                batch_spec((block_b, E)),        # doc_embed
                batch_spec((block_b, E)),        # mean_topic_embeds
                resident_spec((E, H)),           # w1
                resident_spec((1, H)),           # b1
                resident_spec((H, H)),           # w2
                resident_spec((1, H)),           # b2
                resident_spec((H, 2 * Vp)),      # wmu | wlv (fused, lane-padded)
                resident_spec((1, 2 * Vp)),      # bmu | blv (fused, lane-padded)
                resident_spec((Vp, E)),          # construct (zero-padded rows)
            ],
            out_specs=(
                batch_spec((block_b, Vp)),       # wd (softmax topic weights)
                batch_spec((block_b, 128)),      # lane-dense per-row loss block
            ),
        ),
        compiler_params=pltpu.CompilerParams(
            dimension_semantics=("parallel",),
            vmem_limit_bytes=_vmem_limit_bytes(block_b, E, H, Vp),
        ),
        cost_estimate=pl.CostEstimate(
            flops=flops,
            transcendentals=transcendentals,
            bytes_accessed=bytes_accessed,
        ),
    )(doc_embed, mean_embed, w1, b1, w2, b2, w_mulv, b_mulv, cons)

    wd = wd_full[:, :V] if Vp != V else wd_full
    # Finish the VAE loss outside the tiled kernel so the MSE mean is over the
    # FULL batch regardless of block_b (matches F.mse_loss + per-row KLD).
    recon_mse = jnp.sum(loss_parts[:, 0]) / (B * E)
    loss = recon_mse + loss_parts[:, 1]
    return wd, loss


def init_params(key, vocab_size, embed_size, hidden_size):
    ks = jax.random.split(key, 9)

    def linear(kw, kb, fan_in, fan_out):
        bound = 1.0 / jnp.sqrt(fan_in)
        w = jax.random.uniform(kw, (fan_in, fan_out), jnp.float32, -bound, bound)
        b = jax.random.uniform(kb, (1, fan_out), jnp.float32, -bound, bound)
        return w, b

    w1, b1 = linear(ks[0], ks[1], embed_size, hidden_size)
    w2, b2 = linear(ks[2], ks[3], hidden_size, hidden_size)
    wmu, bmu = linear(ks[4], ks[5], hidden_size, vocab_size)
    wlv, blv = linear(ks[6], ks[7], hidden_size, vocab_size)
    construct = jax.random.normal(ks[8], (vocab_size, embed_size), jnp.float32)
    return dict(w1=w1, b1=b1, w2=w2, b2=b2,
                wmu=wmu, bmu=bmu, wlv=wlv, blv=blv,
                construct=construct)


if __name__ == "__main__":
    B, E, H, V = 32, 128, 128, 256

    key = jax.random.PRNGKey(0)
    k_doc, k_mean, k_params = jax.random.split(key, 3)

    # positive embeddings so the row-sum normalization is well behaved
    doc_embed = jax.random.uniform(k_doc, (B, E), jnp.float32, 0.1, 1.0)
    mean_embed = jax.random.uniform(k_mean, (B, E), jnp.float32, 0.1, 1.0)

    params = init_params(k_params, V, E, H)

    wd, loss = jax.jit(policy_forward)(doc_embed, mean_embed, params)
    jax.block_until_ready((wd, loss))

    assert wd.shape == (B, V)
    assert loss.shape == (B,)
    assert bool(jnp.all(jnp.isfinite(wd))) and bool(jnp.all(jnp.isfinite(loss)))
    # softmax rows sum to one (approx reciprocal + bf16 matmuls -> loose tol)
    assert jnp.allclose(jnp.sum(wd, axis=1), 1.0, atol=5e-3)

    print("KERNEL_OK")
</pallas_src>

<mosaic_0001>
module attributes {stable_mosaic.version = 11 : i64} {
  func.func @policy_kernel(%arg0: i32, %arg1: memref<32x128xf32, #tpu.memory_space<vmem>>, %arg2: memref<32x128xf32, #tpu.memory_space<vmem>>, %arg3: memref<128x128xbf16, #tpu.memory_space<vmem>>, %arg4: memref<1x128xf32, #tpu.memory_space<vmem>>, %arg5: memref<128x128xbf16, #tpu.memory_space<vmem>>, %arg6: memref<1x128xf32, #tpu.memory_space<vmem>>, %arg7: memref<128x512xbf16, #tpu.memory_space<vmem>>, %arg8: memref<1x512xf32, #tpu.memory_space<vmem>>, %arg9: memref<256x128xbf16, #tpu.memory_space<vmem>>, %arg10: memref<32x256xf32, #tpu.memory_space<vmem>>, %arg11: memref<32x128xf32, #tpu.memory_space<vmem>>) attributes {dimension_semantics = [#tpu.dimension_semantics<parallel>], iteration_bounds = array<i64: 1>, scalar_prefetch = 0 : i64, scratch_operands = 0 : i64, tpu.core_type = #tpu.core_type<tc>, window_params = [{transform_indices = @transform_0, window_bounds = array<i64: 32, 128>}, {transform_indices = @transform_1, window_bounds = array<i64: 32, 128>}, {pipeline_mode = #tpu.pipeline_mode<synchronous>, transform_indices = @transform_2, window_bounds = array<i64: 128, 128>}, {pipeline_mode = #tpu.pipeline_mode<synchronous>, transform_indices = @transform_3, window_bounds = array<i64: 1, 128>}, {pipeline_mode = #tpu.pipeline_mode<synchronous>, transform_indices = @transform_4, window_bounds = array<i64: 128, 128>}, {pipeline_mode = #tpu.pipeline_mode<synchronous>, transform_indices = @transform_5, window_bounds = array<i64: 1, 128>}, {pipeline_mode = #tpu.pipeline_mode<synchronous>, transform_indices = @transform_6, window_bounds = array<i64: 128, 512>}, {pipeline_mode = #tpu.pipeline_mode<synchronous>, transform_indices = @transform_7, window_bounds = array<i64: 1, 512>}, {pipeline_mode = #tpu.pipeline_mode<synchronous>, transform_indices = @transform_8, window_bounds = array<i64: 256, 128>}, {transform_indices = @transform_9, window_bounds = array<i64: 32, 256>}, {transform_indices = @transform_10, window_bounds = array<i64: 32, 128>}]} {
    %c0 = arith.constant 0 : index
    %c0_0 = arith.constant 0 : index
    %0 = vector.load %arg1[%c0, %c0_0] : memref<32x128xf32, #tpu.memory_space<vmem>>, vector<32x128xf32>
    %c0_1 = arith.constant 0 : index
    %c0_2 = arith.constant 0 : index
    %1 = vector.load %arg2[%c0_1, %c0_2] : memref<32x128xf32, #tpu.memory_space<vmem>>, vector<32x128xf32>
    %2 = arith.addf %0, %1 : vector<32x128xf32>
    %cst = arith.constant 5.000000e-01 : f32
    %3 = vector.broadcast %cst : f32 to vector<32x128xf32>
    %4 = arith.mulf %3, %2 : vector<32x128xf32>
    %cst_3 = arith.constant dense<0.000000e+00> : vector<32xf32>
    %5 = vector.multi_reduction <add>, %4, %cst_3 [1] : vector<32x128xf32> to vector<32xf32>
    %6 = vector.shape_cast %5 : vector<32xf32> to vector<32x1xf32>
    %7 = tpu.reciprocal %6 {approx = true} : vector<32x1xf32> -> vector<32x1xf32>
    %8 = vector.broadcast %7 : vector<32x1xf32> to vector<32x128xf32>
    %9 = arith.mulf %4, %8 : vector<32x128xf32>
    %10 = arith.truncf %9 : vector<32x128xf32> to vector<32x128xbf16>
    %c0_4 = arith.constant 0 : index
    %c0_5 = arith.constant 0 : index
    %11 = vector.load %arg3[%c0_4, %c0_5] : memref<128x128xbf16, #tpu.memory_space<vmem>>, vector<128x128xbf16>
    %cst_6 = arith.constant dense<0.000000e+00> : vector<32x128xf32>
    %12 = tpu.matmul %10, %11, %cst_6 {dimension_numbers = #tpu.dot_dimension_numbers<[1], [0], [0], [1], [0, 0, 1, 1], [], []>} : vector<32x128xbf16>, vector<128x128xbf16>, vector<32x128xf32> -> vector<32x128xf32>
    %c0_7 = arith.constant 0 : index
    %c0_8 = arith.constant 0 : index
    %13 = vector.load %arg4[%c0_7, %c0_8] : memref<1x128xf32, #tpu.memory_space<vmem>>, vector<1x128xf32>
    %14 = vector.broadcast %13 : vector<1x128xf32> to vector<32x128xf32>
    %15 = arith.addf %12, %14 : vector<32x128xf32>
    %cst_9 = arith.constant 0.000000e+00 : f32
    %16 = vector.broadcast %cst_9 : f32 to vector<32x128xf32>
    %17 = arith.maximumf %15, %16 : vector<32x128xf32>
    %18 = arith.truncf %17 : vector<32x128xf32> to vector<32x128xbf16>
    %c0_10 = arith.constant 0 : index
    %c0_11 = arith.constant 0 : index
    %19 = vector.load %arg5[%c0_10, %c0_11] : memref<128x128xbf16, #tpu.memory_space<vmem>>, vector<128x128xbf16>
    %cst_12 = arith.constant dense<0.000000e+00> : vector<32x128xf32>
    %20 = tpu.matmul %18, %19, %cst_12 {dimension_numbers = #tpu.dot_dimension_numbers<[1], [0], [0], [1], [0, 0, 1, 1], [], []>} : vector<32x128xbf16>, vector<128x128xbf16>, vector<32x128xf32> -> vector<32x128xf32>
    %c0_13 = arith.constant 0 : index
    %c0_14 = arith.constant 0 : index
    %21 = vector.load %arg6[%c0_13, %c0_14] : memref<1x128xf32, #tpu.memory_space<vmem>>, vector<1x128xf32>
    %22 = vector.broadcast %21 : vector<1x128xf32> to vector<32x128xf32>
    %23 = arith.addf %20, %22 : vector<32x128xf32>
    %cst_15 = arith.constant 0.000000e+00 : f32
    %24 = vector.broadcast %cst_15 : f32 to vector<32x128xf32>
    %25 = arith.maximumf %23, %24 : vector<32x128xf32>
    %26 = arith.truncf %25 : vector<32x128xf32> to vector<32x128xbf16>
    %c0_16 = arith.constant 0 : index
    %c0_17 = arith.constant 0 : index
    %27 = vector.load %arg7[%c0_16, %c0_17] : memref<128x512xbf16, #tpu.memory_space<vmem>>, vector<128x512xbf16>
    %cst_18 = arith.constant dense<0.000000e+00> : vector<32x512xf32>
    %28 = tpu.matmul %26, %27, %cst_18 {dimension_numbers = #tpu.dot_dimension_numbers<[1], [0], [0], [1], [0, 0, 1, 1], [], []>} : vector<32x128xbf16>, vector<128x512xbf16>, vector<32x512xf32> -> vector<32x512xf32>
    %c0_19 = arith.constant 0 : index
    %c0_20 = arith.constant 0 : index
    %29 = vector.load %arg8[%c0_19, %c0_20] : memref<1x512xf32, #tpu.memory_space<vmem>>, vector<1x512xf32>
    %30 = vector.broadcast %29 : vector<1x512xf32> to vector<32x512xf32>
    %31 = arith.addf %28, %30 : vector<32x512xf32>
    %32 = vector.extract_strided_slice %31 {offsets = [0, 0], sizes = [32, 256], strides = [1, 1]} : vector<32x512xf32> to vector<32x256xf32>
    %33 = vector.extract_strided_slice %31 {offsets = [0, 256], sizes = [32, 256], strides = [1, 1]} : vector<32x512xf32> to vector<32x256xf32>
    %cst_21 = arith.constant dense<0xFF800000> : vector<32xf32>
    %34 = vector.multi_reduction <maximumf>, %32, %cst_21 [1] : vector<32x256xf32> to vector<32xf32>
    %35 = vector.shape_cast %34 : vector<32xf32> to vector<32x1xf32>
    %36 = vector.broadcast %35 : vector<32x1xf32> to vector<32x256xf32>
    %37 = arith.subf %32, %36 : vector<32x256xf32>
    %38 = math.exp %37 : vector<32x256xf32>
    %cst_22 = arith.constant dense<0.000000e+00> : vector<32xf32>
    %39 = vector.multi_reduction <add>, %38, %cst_22 [1] : vector<32x256xf32> to vector<32xf32>
    %40 = vector.shape_cast %39 : vector<32xf32> to vector<32x1xf32>
    %41 = tpu.reciprocal %40 {approx = true} : vector<32x1xf32> -> vector<32x1xf32>
    %42 = vector.broadcast %41 : vector<32x1xf32> to vector<32x256xf32>
    %43 = arith.mulf %38, %42 : vector<32x256xf32>
    %c0_23 = arith.constant 0 : index
    %c0_24 = arith.constant 0 : index
    %44 = vector.load %arg10[%c0_23, %c0_24] : memref<32x256xf32, #tpu.memory_space<vmem>>, vector<32x256xf32>
    tpu.vector_store %arg10[%c0_23, %c0_24], %43 {strides = array<i32>} : memref<32x256xf32, #tpu.memory_space<vmem>>, vector<32x256xf32>,
    %45 = arith.truncf %43 : vector<32x256xf32> to vector<32x256xbf16>
    %c0_25 = arith.constant 0 : index
    %c0_26 = arith.constant 0 : index
    %46 = vector.load %arg9[%c0_25, %c0_26] : memref<256x128xbf16, #tpu.memory_space<vmem>>, vector<256x128xbf16>
    %cst_27 = arith.constant dense<0.000000e+00> : vector<32x128xf32>
    %47 = tpu.matmul %45, %46, %cst_27 {dimension_numbers = #tpu.dot_dimension_numbers<[1], [0], [0], [1], [0, 0, 1, 1], [], []>} : vector<32x256xbf16>, vector<256x128xbf16>, vector<32x128xf32> -> vector<32x128xf32>
    %48 = arith.subf %4, %47 : vector<32x128xf32>
    %49 = arith.mulf %48, %48 : vector<32x128xf32>
    %cst_28 = arith.constant dense<0.000000e+00> : vector<32xf32>
    %50 = vector.multi_reduction <add>, %49, %cst_28 [1] : vector<32x128xf32> to vector<32xf32>
    %51 = vector.shape_cast %50 : vector<32xf32> to vector<32x1xf32>
    %cst_29 = arith.constant 1.000000e+00 : f32
    %52 = vector.broadcast %cst_29 : f32 to vector<32x256xf32>
    %53 = arith.addf %52, %33 : vector<32x256xf32>
    %54 = arith.mulf %32, %32 : vector<32x256xf32>
    %55 = arith.subf %53, %54 : vector<32x256xf32>
    %56 = math.exp %33 : vector<32x256xf32>
    %57 = arith.subf %55, %56 : vector<32x256xf32>
    %cst_30 = arith.constant dense<0.000000e+00> : vector<32xf32>
    %58 = vector.multi_reduction <add>, %57, %cst_30 [1] : vector<32x256xf32> to vector<32xf32>
    %59 = vector.shape_cast %58 : vector<32xf32> to vector<32x1xf32>
    %cst_31 = arith.constant -5.000000e-01 : f32
    %60 = vector.broadcast %cst_31 : f32 to vector<32x1xf32>
    %61 = arith.mulf %60, %59 : vector<32x1xf32>
    %62 = tpu.iota {dimensions = array<i32: 1>} : vector<32x128xi32>
    %c0_i32 = arith.constant 0 : i32
    %63 = vector.broadcast %c0_i32 : i32 to vector<32x128xi32>
    %64 = arith.cmpi eq, %62, %63 : vector<32x128xi32>
    %c1_i32 = arith.constant 1 : i32
    %65 = vector.broadcast %c1_i32 : i32 to vector<32x128xi32>
    %66 = arith.cmpi eq, %62, %65 : vector<32x128xi32>
    %cst_32 = arith.constant 0.000000e+00 : f32
    %67 = vector.shape_cast %61 : vector<32x1xf32> to vector<32x1xf32>
    %68 = vector.broadcast %67 : vector<32x1xf32> to vector<32x128xf32>
    %69 = vector.broadcast %cst_32 : f32 to vector<32x128xf32>
    %70 = arith.select %66, %68, %69 : vector<32x128xi1>, vector<32x128xf32>
    %71 = vector.shape_cast %51 : vector<32x1xf32> to vector<32x1xf32>
    %72 = vector.broadcast %71 : vector<32x1xf32> to vector<32x128xf32>
    %73 = arith.select %64, %72, %70 : vector<32x128xi1>, vector<32x128xf32>
    %c0_33 = arith.constant 0 : index
    %c0_34 = arith.constant 0 : index
    %74 = vector.load %arg11[%c0_33, %c0_34] : memref<32x128xf32, #tpu.memory_space<vmem>>, vector<32x128xf32>
    tpu.vector_store %arg11[%c0_33, %c0_34], %73 {strides = array<i32>} : memref<32x128xf32, #tpu.memory_space<vmem>>, vector<32x128xf32>,
    return
  }
  func.func @transform_0(%arg0: i32) -> (i32, i32) {
    %c0_i32 = arith.constant 0 : i32
    %c0_i32_0 = arith.constant 0 : i32
    return %arg0, %c0_i32 : i32, i32
  }
  func.func @transform_1(%arg0: i32) -> (i32, i32) {
    %c0_i32 = arith.constant 0 : i32
    %c0_i32_0 = arith.constant 0 : i32
    return %arg0, %c0_i32 : i32, i32
  }
  func.func @transform_2(%arg0: i32) -> (i32, i32) {
    %c0_i32 = arith.constant 0 : i32
    %c0_i32_0 = arith.constant 0 : i32
    %c0_i32_1 = arith.constant 0 : i32
    return %c0_i32, %c0_i32_0 : i32, i32
  }
  func.func @transform_3(%arg0: i32) -> (i32, i32) {
    %c0_i32 = arith.constant 0 : i32
    %c0_i32_0 = arith.constant 0 : i32
    %c0_i32_1 = arith.constant 0 : i32
    return %c0_i32, %c0_i32_0 : i32, i32
  }
  func.func @transform_4(%arg0: i32) -> (i32, i32) {
    %c0_i32 = arith.constant 0 : i32
    %c0_i32_0 = arith.constant 0 : i32
    %c0_i32_1 = arith.constant 0 : i32
    return %c0_i32, %c0_i32_0 : i32, i32
  }
  func.func @transform_5(%arg0: i32) -> (i32, i32) {
    %c0_i32 = arith.constant 0 : i32
    %c0_i32_0 = arith.constant 0 : i32
    %c0_i32_1 = arith.constant 0 : i32
    return %c0_i32, %c0_i32_0 : i32, i32
  }
  func.func @transform_6(%arg0: i32) -> (i32, i32) {
    %c0_i32 = arith.constant 0 : i32
    %c0_i32_0 = arith.constant 0 : i32
    %c0_i32_1 = arith.constant 0 : i32
    return %c0_i32, %c0_i32_0 : i32, i32
  }
  func.func @transform_7(%arg0: i32) -> (i32, i32) {
    %c0_i32 = arith.constant 0 : i32
    %c0_i32_0 = arith.constant 0 : i32
    %c0_i32_1 = arith.constant 0 : i32
    return %c0_i32, %c0_i32_0 : i32, i32
  }
  func.func @transform_8(%arg0: i32) -> (i32, i32) {
    %c0_i32 = arith.constant 0 : i32
    %c0_i32_0 = arith.constant 0 : i32
    %c0_i32_1 = arith.constant 0 : i32
    return %c0_i32, %c0_i32_0 : i32, i32
  }
  func.func @transform_9(%arg0: i32) -> (i32, i32) {
    %c0_i32 = arith.constant 0 : i32
    %c0_i32_0 = arith.constant 0 : i32
    return %arg0, %c0_i32 : i32, i32
  }
  func.func @transform_10(%arg0: i32) -> (i32, i32) {
    %c0_i32 = arith.constant 0 : i32
    %c0_i32_0 = arith.constant 0 : i32
    return %arg0, %c0_i32 : i32, i32
  }
}

</mosaic_0001>

<llo_original>
// kernel: policy_forward.1
$region0: #{policy_forward.1}
  #allocation0 [shape = 'u32[]', space=smem, size = 0x4, offset = 0x4, fixed_abs, tag = 'smem constant byte address 0x4 - core index']
  #allocation1 [shape = 'u32[144,128]{1,0:T(1,128)}', space=vmem, size = 0x12000, scoped, tag = 'internal scratch']
  %s0 = inlined_call_operand.vmem [shape: f32[32,128], index: 0, kind: input, shape index: {}]
  %s1 = inlined_call_operand.vmem [shape: f32[32,128], index: 1, kind: input, shape index: {}]
  %s2 = inlined_call_operand.vmem [shape: bf16[128,128], index: 2, kind: input, shape index: {}]
  %s3 = inlined_call_operand.vmem [shape: f32[1,128], index: 3, kind: input, shape index: {}]
  %s4 = inlined_call_operand.vmem [shape: bf16[128,128], index: 4, kind: input, shape index: {}]
  %s5 = inlined_call_operand.vmem [shape: f32[1,128], index: 5, kind: input, shape index: {}]
  %s6 = inlined_call_operand.vmem [shape: bf16[128,512], index: 6, kind: input, shape index: {}]
  %s7 = inlined_call_operand.vmem [shape: f32[1,512], index: 7, kind: input, shape index: {}]
  %s8 = inlined_call_operand.vmem [shape: bf16[256,128], index: 8, kind: input, shape index: {}]
  %s9 = inlined_call_operand.hbm [shape: f32[32,256], index: 9, kind: output, shape index: {0}]
  %s10 = inlined_call_operand.vmem [shape: f32[32,128], index: 10, kind: output, shape index: {1}]
  %11 = xla_tuple %s9, %s10
  %s12 = sld [smem:[#allocation0]]
  $region54: #{policy_forward.1} parent=0
    _
  %s14 = ssub.s32 1, %s12
  %s15 = scalar_select 0, %s14, %s12
  $region1: #{policy_forward.1} parent=0
    #allocation2 [shape = 'u8[32768]{0}', space=vmem, size = 0x8000, scoped, tag = 'output window, operand 0, single buffered']
    #allocation3 [shape = 's32[1]{0}', space=sflag, size = 0x4, scoped, tag = 'scoped memory for policy_forward.1']
    %16 = vsyncpa [#allocation3], 0
    // Predicated region
    $region2: #{policy_forward.1} parent=1 // pred_check
      _
    $region3: #{policy_forward.1} parent=1 // pred_check_branch
      %18 = sbr.rel (0) target = $region5
    $region4: #{policy_forward.1} parent=1 // pred_region
      _
    $region5: #{policy_forward.1} parent=1 // pred_fallthru
      _
    // Predicated region
    $region6: #{policy_forward.1} parent=1 // pred_check
      _
    $region7: #{policy_forward.1} parent=1 // pred_check_branch
      %20 = sbr.rel (0) target = $region9
    $region8: #{policy_forward.1} parent=1 // pred_region
      _
    $region9: #{policy_forward.1} parent=1 // pred_fallthru
      _
    // Predicated region
    $region10: #{policy_forward.1} parent=1 // pred_check
      _
    $region11: #{policy_forward.1} parent=1 // pred_check_branch
      %22 = sbr.rel (0) target = $region13
    $region12: #{policy_forward.1} parent=1 // pred_region
      _
    $region13: #{policy_forward.1} parent=1 // pred_fallthru
      _
    // Predicated region
    $region14: #{policy_forward.1} parent=1 // pred_check
      _
    $region15: #{policy_forward.1} parent=1 // pred_check_branch
      %24 = sbr.rel (0) target = $region17
    $region16: #{policy_forward.1} parent=1 // pred_region
      _
    $region17: #{policy_forward.1} parent=1 // pred_fallthru
      _
    // Predicated region
    $region18: #{policy_forward.1} parent=1 // pred_check
      _
    $region19: #{policy_forward.1} parent=1 // pred_check_branch
      %26 = sbr.rel (0) target = $region21
    $region20: #{policy_forward.1} parent=1 // pred_region
      _
    $region21: #{policy_forward.1} parent=1 // pred_fallthru
      _
    // Predicated region
    $region22: #{policy_forward.1} parent=1 // pred_check
      _
    $region23: #{policy_forward.1} parent=1 // pred_check_branch
      %28 = sbr.rel (0) target = $region25
    $region24: #{policy_forward.1} parent=1 // pred_region
      _
    $region25: #{policy_forward.1} parent=1 // pred_fallthru
      _
    // Predicated region
    $region26: #{policy_forward.1} parent=1 // pred_check
      _
    $region27: #{policy_forward.1} parent=1 // pred_check_branch
      %30 = sbr.rel (0) target = $region29
    $region28: #{policy_forward.1} parent=1 // pred_region
      _
    $region29: #{policy_forward.1} parent=1 // pred_fallthru
      _
    // Predicated region
    $region30: #{policy_forward.1} parent=1 // pred_check
      _
    $region31: #{policy_forward.1} parent=1 // pred_check_branch
      %32 = sbr.rel (0) target = $region33
    $region32: #{policy_forward.1} parent=1 // pred_region
      _
    $region33: #{policy_forward.1} parent=1 // pred_fallthru
      _
    // Predicated region
    $region34: #{policy_forward.1} parent=1 // pred_check
      _
    $region35: #{policy_forward.1} parent=1 // pred_check_branch
      %34 = sbr.rel (0) target = $region37
    $region36: #{policy_forward.1} parent=1 // pred_region
      _
    $region37: #{policy_forward.1} parent=1 // pred_fallthru
      _
    %v36 = vld [vmem:[%s0] sm:$0xff]
    %v37 = vld [vmem:[%s0 + $0x8] sm:$0xff]
    %v38 = vld [vmem:[%s0 + $0x10] sm:$0xff]
    %v39 = vld [vmem:[%s0 + $0x18] sm:$0xff]
    %v40 = vld [vmem:[%s1] sm:$0xff]
    %v41 = vld [vmem:[%s1 + $0x8] sm:$0xff]
    %v42 = vld [vmem:[%s1 + $0x10] sm:$0xff]
    %v43 = vld [vmem:[%s1 + $0x18] sm:$0xff]
    %v44 = vadd.f32 %v36, %v40
    %v45 = vadd.f32 %v37, %v41
    %v46 = vadd.f32 %v38, %v42
    %v47 = vadd.f32 %v39, %v43
    %v48 = vmul.f32 %v44, 0.5
    %v49 = vmul.f32 %v45, 0.5
    %v50 = vmul.f32 %v46, 0.5
    %v51 = vmul.f32 %v47, 0.5
    %52 = vadd.xlane.f32.xlu0 %v48
    %v53 = vpop.xlane.xlu0 %52
    %54 = vadd.xlane.f32.xlu0 %v49
    %v55 = vpop.xlane.xlu0 %54
    %56 = vadd.xlane.f32.xlu0 %v50
    %v57 = vpop.xlane.xlu0 %56
    %58 = vadd.xlane.f32.xlu0 %v51
    %v59 = vpop.xlane.xlu0 %58
    %v60 = vrcp.pop %v53
    %v61 = vrcp.pop %v55
    %v62 = vrcp.pop %v57
    %v63 = vrcp.pop %v59
    %v64 = vmul.f32 %v48, %v60
    %v65 = vmul.f32 %v49, %v61
    %v66 = vmul.f32 %v50, %v62
    %v67 = vmul.f32 %v51, %v63
    %v68 = vpack.c.bf16 %v65, %v64
    %v69 = vpack.c.bf16 %v67, %v66
    %v70 = vld [vmem:[%s2] sm:$0xf]
    %v71 = vld [vmem:[%s2 + $0x4] sm:$0xf]
    %v72 = vld [vmem:[%s2 + $0x8] sm:$0xf]
    %v73 = vld [vmem:[%s2 + $0xc] sm:$0xf]
    %v74 = vld [vmem:[%s2 + $0x10] sm:$0xf]
    %v75 = vld [vmem:[%s2 + $0x14] sm:$0xf]
    %v76 = vld [vmem:[%s2 + $0x18] sm:$0xf]
    %v77 = vld [vmem:[%s2 + $0x1c] sm:$0xf]
    %v78 = vld [vmem:[%s2 + $0x20] sm:$0xf]
    %v79 = vld [vmem:[%s2 + $0x24] sm:$0xf]
    %v80 = vld [vmem:[%s2 + $0x28] sm:$0xf]
    %v81 = vld [vmem:[%s2 + $0x2c] sm:$0xf]
    %v82 = vld [vmem:[%s2 + $0x30] sm:$0xf]
    %v83 = vld [vmem:[%s2 + $0x34] sm:$0xf]
    %v84 = vld [vmem:[%s2 + $0x38] sm:$0xf]
    %v85 = vld [vmem:[%s2 + $0x3c] sm:$0xf]
    %v86 = vld [vmem:[%s3] sm:$0x1]
    %v88 = vlaneseq
    %v89 = vshrl.u32 %v88, 7
    %v90 = vsub.s32 0, %v89
    %v91 = vrot.slane %v86, %v90
    %v109 = vunpack.c.l.b16 %v70
    %v110 = vunpack.c.l.b16 %v71
    %v111 = vunpack.c.l.b16 %v72
    %v112 = vunpack.c.l.b16 %v73
    %v113 = vunpack.c.l.b16 %v74
    %v114 = vunpack.c.l.b16 %v75
    %v115 = vunpack.c.l.b16 %v76
    %v116 = vunpack.c.l.b16 %v77
    %v117 = vunpack.c.l.b16 %v78
    %v118 = vunpack.c.l.b16 %v79
    %v119 = vunpack.c.l.b16 %v80
    %v120 = vunpack.c.l.b16 %v81
    %v121 = vunpack.c.l.b16 %v82
    %v122 = vunpack.c.l.b16 %v83
    %v123 = vunpack.c.l.b16 %v84
    %v124 = vunpack.c.l.b16 %v85
    %v125 = vpack.c.b16 %v110, %v109
    %v126 = vpack.c.b16 %v112, %v111
    %v127 = vpack.c.b16 %v114, %v113
    %v128 = vpack.c.b16 %v116, %v115
    %v129 = vpack.c.b16 %v118, %v117
    %v130 = vpack.c.b16 %v120, %v119
    %v131 = vpack.c.b16 %v122, %v121
    %v132 = vpack.c.b16 %v124, %v123
    %141 = vmatprep.subr.bf16.mxu0 0
    %142 = vmatpush1.bf16.msra.mxu0 %v125
    %143 = vmatprep.subr.bf16.mxu0 0
    %144 = vmatpush1.bf16.msra.mxu0 %v126
    %145 = vmatprep.subr.bf16.mxu0 0
    %146 = vmatpush1.bf16.msra.mxu0 %v127
    %147 = vmatprep.subr.bf16.mxu0 0
    %148 = vmatpush1.bf16.msra.mxu0 %v128
    %149 = vmatprep.subr.bf16.mxu0 0
    %150 = vmatpush1.bf16.msra.mxu0 %v129
    %151 = vmatprep.subr.bf16.mxu0 0
    %152 = vmatpush1.bf16.msra.mxu0 %v130
    %153 = vmatprep.subr.bf16.mxu0 0
    %154 = vmatpush1.bf16.msra.mxu0 %v131
    %155 = vmatprep.subr.bf16.mxu0 0
    %156 = vmatpush1.bf16.msra.mxu0 %v132
    %157 = vmatprep.subr.bf16.mxu0 0
    %158 = vmatpush1.bf16.msra.mxu0 0
    %159 = vmatprep.subr.bf16.mxu0 0
    %160 = vmatpush1.bf16.msra.mxu0 0
    %161 = vmatprep.subr.bf16.mxu0 0
    %162 = vmatpush1.bf16.msra.mxu0 0
    %163 = vmatprep.subr.bf16.mxu0 0
    %164 = vmatpush1.bf16.msra.mxu0 0
    %165 = vmatprep.subr.bf16.mxu0 0
    %166 = vmatpush1.bf16.msra.mxu0 0
    %167 = vmatprep.subr.bf16.mxu0 0
    %168 = vmatpush1.bf16.msra.mxu0 0
    %169 = vmatprep.subr.bf16.mxu0 0
    %170 = vmatpush1.bf16.msra.mxu0 0
    %171 = vmatprep.subr.bf16.mxu0 0
    %172 = vmatpush1.bf16.msra.mxu0 0
    %173 = vmatprep.mubr.bf16.mxu0 0
    %174 = vmatmul.mubr.bf16.gmra.mrb[0].mxu0 %v68
    %v175 = vpop.f32.mrb[0].mxu0
    %v176 = vadd.f32 %v91, %v175
    %v177 = vpop.f32.mrb[0].mxu0
    %v178 = vpop.f32.mrb[0].mxu0
    %v179 = vadd.f32 %v91, %v178
    %v180 = vpop.f32.mrb[0].mxu0
    %181 = vmatprep.mubr.bf16.mxu0 0
    %182 = vmatmul.mubr.bf16.gmra.mrb[0].mxu0 %v69
    %v183 = vpop.f32.mrb[0].mxu0
    %v184 = vadd.f32 %v91, %v183
    %v185 = vpop.f32.mrb[0].mxu0
    %v186 = vpop.f32.mrb[0].mxu0
    %v187 = vadd.f32 %v91, %v186
    %v188 = vpop.f32.mrb[0].mxu0
    %189 = vdwg.mxu0
    %v190 = vmax.f32 %v176, 0.0
    %v191 = vmax.f32 %v179, 0.0
    %v192 = vmax.f32 %v184, 0.0
    %v193 = vmax.f32 %v187, 0.0
    %v194 = vpack.c.bf16 %v191, %v190
    %v195 = vpack.c.bf16 %v193, %v192
    %v196 = vld [vmem:[%s4] sm:$0xf]
    %v197 = vld [vmem:[%s4 + $0x4] sm:$0xf]
    %v198 = vld [vmem:[%s4 + $0x8] sm:$0xf]
    %v199 = vld [vmem:[%s4 + $0xc] sm:$0xf]
    %v200 = vld [vmem:[%s4 + $0x10] sm:$0xf]
    %v201 = vld [vmem:[%s4 + $0x14] sm:$0xf]
    %v202 = vld [vmem:[%s4 + $0x18] sm:$0xf]
    %v203 = vld [vmem:[%s4 + $0x1c] sm:$0xf]
    %v204 = vld [vmem:[%s4 + $0x20] sm:$0xf]
    %v205 = vld [vmem:[%s4 + $0x24] sm:$0xf]
    %v206 = vld [vmem:[%s4 + $0x28] sm:$0xf]
    %v207 = vld [vmem:[%s4 + $0x2c] sm:$0xf]
    %v208 = vld [vmem:[%s4 + $0x30] sm:$0xf]
    %v209 = vld [vmem:[%s4 + $0x34] sm:$0xf]
    %v210 = vld [vmem:[%s4 + $0x38] sm:$0xf]
    %v211 = vld [vmem:[%s4 + $0x3c] sm:$0xf]
    %v212 = vld [vmem:[%s5] sm:$0x1]
    %v214 = vlaneseq
    %v215 = vshrl.u32 %v214, 7
    %v216 = vsub.s32 0, %v215
    %v217 = vrot.slane %v212, %v216
    %v235 = vunpack.c.l.b16 %v196
    %v236 = vunpack.c.l.b16 %v197
    %v237 = vunpack.c.l.b16 %v198
    %v238 = vunpack.c.l.b16 %v199
    %v239 = vunpack.c.l.b16 %v200
    %v240 = vunpack.c.l.b16 %v201
    %v241 = vunpack.c.l.b16 %v202
    %v242 = vunpack.c.l.b16 %v203
    %v243 = vunpack.c.l.b16 %v204
    %v244 = vunpack.c.l.b16 %v205
    %v245 = vunpack.c.l.b16 %v206
    %v246 = vunpack.c.l.b16 %v207
    %v247 = vunpack.c.l.b16 %v208
    %v248 = vunpack.c.l.b16 %v209
    %v249 = vunpack.c.l.b16 %v210
    %v250 = vunpack.c.l.b16 %v211
    %v251 = vpack.c.b16 %v236, %v235
    %v252 = vpack.c.b16 %v238, %v237
    %v253 = vpack.c.b16 %v240, %v239
    %v254 = vpack.c.b16 %v242, %v241
    %v255 = vpack.c.b16 %v244, %v243
    %v256 = vpack.c.b16 %v246, %v245
    %v257 = vpack.c.b16 %v248, %v247
    %v258 = vpack.c.b16 %v250, %v249
    %267 = vmatprep.subr.bf16.mxu0 0
    %268 = vmatpush1.bf16.msra.mxu0 %v251
    %269 = vmatprep.subr.bf16.mxu0 0
    %270 = vmatpush1.bf16.msra.mxu0 %v252
    %271 = vmatprep.subr.bf16.mxu0 0
    %272 = vmatpush1.bf16.msra.mxu0 %v253
    %273 = vmatprep.subr.bf16.mxu0 0
    %274 = vmatpush1.bf16.msra.mxu0 %v254
    %275 = vmatprep.subr.bf16.mxu0 0
    %276 = vmatpush1.bf16.msra.mxu0 %v255
    %277 = vmatprep.subr.bf16.mxu0 0
    %278 = vmatpush1.bf16.msra.mxu0 %v256
    %279 = vmatprep.subr.bf16.mxu0 0
    %280 = vmatpush1.bf16.msra.mxu0 %v257
    %281 = vmatprep.subr.bf16.mxu0 0
    %282 = vmatpush1.bf16.msra.mxu0 %v258
    %283 = vmatprep.subr.bf16.mxu0 0
    %284 = vmatpush1.bf16.msra.mxu0 0
    %285 = vmatprep.subr.bf16.mxu0 0
    %286 = vmatpush1.bf16.msra.mxu0 0
    %287 = vmatprep.subr.bf16.mxu0 0
    %288 = vmatpush1.bf16.msra.mxu0 0
    %289 = vmatprep.subr.bf16.mxu0 0
    %290 = vmatpush1.bf16.msra.mxu0 0
    %291 = vmatprep.subr.bf16.mxu0 0
    %292 = vmatpush1.bf16.msra.mxu0 0
    %293 = vmatprep.subr.bf16.mxu0 0
    %294 = vmatpush1.bf16.msra.mxu0 0
    %295 = vmatprep.subr.bf16.mxu0 0
    %296 = vmatpush1.bf16.msra.mxu0 0
    %297 = vmatprep.subr.bf16.mxu0 0
    %298 = vmatpush1.bf16.msra.mxu0 0
    %299 = vmatprep.mubr.bf16.mxu0 0
    %300 = vmatmul.mubr.bf16.gmra.mrb[0].mxu0 %v194
    %v301 = vpop.f32.mrb[0].mxu0
    %v302 = vadd.f32 %v217, %v301
    %v303 = vpop.f32.mrb[0].mxu0
    %v304 = vpop.f32.mrb[0].mxu0
    %v305 = vadd.f32 %v217, %v304
    %v306 = vpop.f32.mrb[0].mxu0
    %307 = vmatprep.mubr.bf16.mxu0 0
    %308 = vmatmul.mubr.bf16.gmra.mrb[0].mxu0 %v195
    %v309 = vpop.f32.mrb[0].mxu0
    %v310 = vadd.f32 %v217, %v309
    %v311 = vpop.f32.mrb[0].mxu0
    %v312 = vpop.f32.mrb[0].mxu0
    %v313 = vadd.f32 %v217, %v312
    %v314 = vpop.f32.mrb[0].mxu0
    %315 = vdwg.mxu0
    %v316 = vmax.f32 %v302, 0.0
    %v317 = vmax.f32 %v305, 0.0
    %v318 = vmax.f32 %v310, 0.0
    %v319 = vmax.f32 %v313, 0.0
    %v320 = vpack.c.bf16 %v317, %v316
    %v321 = vpack.c.bf16 %v319, %v318
    %v322 = vld [vmem:[%s6] sm:$0xff]
    %v323 = vld [vmem:[%s6 + $0x8] sm:$0xff]
    %v324 = vld [vmem:[%s6 + $0x10] sm:$0xff]
    %v325 = vld [vmem:[%s6 + $0x18] sm:$0xff]
    %v326 = vld [vmem:[%s6 + $0x20] sm:$0xff]
    %v327 = vld [vmem:[%s6 + $0x28] sm:$0xff]
    %v328 = vld [vmem:[%s6 + $0x30] sm:$0xff]
    %v329 = vld [vmem:[%s6 + $0x38] sm:$0xff]
    %v330 = vld [vmem:[%s6 + $0x40] sm:$0xff]
    %v331 = vld [vmem:[%s6 + $0x48] sm:$0xff]
    %v332 = vld [vmem:[%s6 + $0x50] sm:$0xff]
    %v333 = vld [vmem:[%s6 + $0x58] sm:$0xff]
    %v334 = vld [vmem:[%s6 + $0x60] sm:$0xff]
    %v335 = vld [vmem:[%s6 + $0x68] sm:$0xff]
    %v336 = vld [vmem:[%s6 + $0x70] sm:$0xff]
    %v337 = vld [vmem:[%s6 + $0x78] sm:$0xff]
    %v338 = vld [vmem:[%s6 + $0x80] sm:$0xff]
    %v339 = vld [vmem:[%s6 + $0x88] sm:$0xff]
    %v340 = vld [vmem:[%s6 + $0x90] sm:$0xff]
    %v341 = vld [vmem:[%s6 + $0x98] sm:$0xff]
    %v342 = vld [vmem:[%s6 + $0xa0] sm:$0xff]
    %v343 = vld [vmem:[%s6 + $0xa8] sm:$0xff]
    %v344 = vld [vmem:[%s6 + $0xb0] sm:$0xff]
    %v345 = vld [vmem:[%s6 + $0xb8] sm:$0xff]
    %v346 = vld [vmem:[%s6 + $0xc0] sm:$0xff]
    %v347 = vld [vmem:[%s6 + $0xc8] sm:$0xff]
    %v348 = vld [vmem:[%s6 + $0xd0] sm:$0xff]
    %v349 = vld [vmem:[%s6 + $0xd8] sm:$0xff]
    %v350 = vld [vmem:[%s6 + $0xe0] sm:$0xff]
    %v351 = vld [vmem:[%s6 + $0xe8] sm:$0xff]
    %v352 = vld [vmem:[%s6 + $0xf0] sm:$0xff]
    %v353 = vld [vmem:[%s6 + $0xf8] sm:$0xff]
    %v354 = vld [vmem:[%s7] sm:$0xf]
    %v356 = vlaneseq
    %v357 = vshrl.u32 %v356, 7
    %v358 = vsub.s32 0, %v357
    %v359 = vrot.slane %v354, %v358
    %v360 = vlaneseq
    %v361 = vshrl.u32 %v360, 7
    %v362 = vsub.s32 1, %v361
    %v363 = vrot.slane %v354, %v362
    %v364 = vlaneseq
    %v365 = vshrl.u32 %v364, 7
    %v366 = vsub.s32 2, %v365
    %v367 = vrot.slane %v354, %v366
    %v368 = vlaneseq
    %v369 = vshrl.u32 %v368, 7
    %v370 = vsub.s32 3, %v369
    %v371 = vrot.slane %v354, %v370
    %v408 = vunpack.c.l.b16 %v322
    %v409 = vunpack.c.h.b16 %v322
    %v410 = vunpack.c.l.b16 %v323
    %v411 = vunpack.c.h.b16 %v323
    %v412 = vunpack.c.l.b16 %v324
    %v413 = vunpack.c.h.b16 %v324
    %v414 = vunpack.c.l.b16 %v325
    %v415 = vunpack.c.h.b16 %v325
    %v416 = vunpack.c.l.b16 %v326
    %v417 = vunpack.c.h.b16 %v326
    %v418 = vunpack.c.l.b16 %v327
    %v419 = vunpack.c.h.b16 %v327
    %v420 = vunpack.c.l.b16 %v328
    %v421 = vunpack.c.h.b16 %v328
    %v422 = vunpack.c.l.b16 %v329
    %v423 = vunpack.c.h.b16 %v329
    %v424 = vunpack.c.l.b16 %v330
    %v425 = vunpack.c.h.b16 %v330
    %v426 = vunpack.c.l.b16 %v331
    %v427 = vunpack.c.h.b16 %v331
    %v428 = vunpack.c.l.b16 %v332
    %v429 = vunpack.c.h.b16 %v332
    %v430 = vunpack.c.l.b16 %v333
    %v431 = vunpack.c.h.b16 %v333
    %v432 = vunpack.c.l.b16 %v334
    %v433 = vunpack.c.h.b16 %v334
    %v434 = vunpack.c.l.b16 %v335
    %v435 = vunpack.c.h.b16 %v335
    %v436 = vunpack.c.l.b16 %v336
    %v437 = vunpack.c.h.b16 %v336
    %v438 = vunpack.c.l.b16 %v337
    %v439 = vunpack.c.h.b16 %v337
    %v440 = vunpack.c.l.b16 %v338
    %v441 = vunpack.c.h.b16 %v338
    %v442 = vunpack.c.l.b16 %v339
    %v443 = vunpack.c.h.b16 %v339
    %v444 = vunpack.c.l.b16 %v340
    %v445 = vunpack.c.h.b16 %v340
    %v446 = vunpack.c.l.b16 %v341
    %v447 = vunpack.c.h.b16 %v341
    %v448 = vunpack.c.l.b16 %v342
    %v449 = vunpack.c.h.b16 %v342
    %v450 = vunpack.c.l.b16 %v343
    %v451 = vunpack.c.h.b16 %v343
    %v452 = vunpack.c.l.b16 %v344
    %v453 = vunpack.c.h.b16 %v344
    %v454 = vunpack.c.l.b16 %v345
    %v455 = vunpack.c.h.b16 %v345
    %v456 = vunpack.c.l.b16 %v346
    %v457 = vunpack.c.h.b16 %v346
    %v458 = vunpack.c.l.b16 %v347
    %v459 = vunpack.c.h.b16 %v347
    %v460 = vunpack.c.l.b16 %v348
    %v461 = vunpack.c.h.b16 %v348
    %v462 = vunpack.c.l.b16 %v349
    %v463 = vunpack.c.h.b16 %v349
    %v464 = vunpack.c.l.b16 %v350
    %v465 = vunpack.c.h.b16 %v350
    %v466 = vunpack.c.l.b16 %v351
    %v467 = vunpack.c.h.b16 %v351
    %v468 = vunpack.c.l.b16 %v352
    %v469 = vunpack.c.h.b16 %v352
    %v470 = vunpack.c.l.b16 %v353
    %v471 = vunpack.c.h.b16 %v353
    %v472 = vpack.c.b16 %v412, %v408
    %v473 = vpack.c.b16 %v413, %v409
    %v474 = vpack.c.b16 %v414, %v410
    %v475 = vpack.c.b16 %v415, %v411
    %v476 = vpack.c.b16 %v420, %v416
    %v477 = vpack.c.b16 %v421, %v417
    %v478 = vpack.c.b16 %v422, %v418
    %v479 = vpack.c.b16 %v423, %v419
    %v480 = vpack.c.b16 %v428, %v424
    %v481 = vpack.c.b16 %v429, %v425
    %v482 = vpack.c.b16 %v430, %v426
    %v483 = vpack.c.b16 %v431, %v427
    %v484 = vpack.c.b16 %v436, %v432
    %v485 = vpack.c.b16 %v437, %v433
    %v486 = vpack.c.b16 %v438, %v434
    %v487 = vpack.c.b16 %v439, %v435
    %v488 = vpack.c.b16 %v444, %v440
    %v489 = vpack.c.b16 %v445, %v441
    %v490 = vpack.c.b16 %v446, %v442
    %v491 = vpack.c.b16 %v447, %v443
    %v492 = vpack.c.b16 %v452, %v448
    %v493 = vpack.c.b16 %v453, %v449
    %v494 = vpack.c.b16 %v454, %v450
    %v495 = vpack.c.b16 %v455, %v451
    %v496 = vpack.c.b16 %v460, %v456
    %v497 = vpack.c.b16 %v461, %v457
    %v498 = vpack.c.b16 %v462, %v458
    %v499 = vpack.c.b16 %v463, %v459
    %v500 = vpack.c.b16 %v468, %v464
    %v501 = vpack.c.b16 %v469, %v465
    %v502 = vpack.c.b16 %v470, %v466
    %v503 = vpack.c.b16 %v471, %v467
    %536 = vmatprep.subr.bf16.mxu0 %v473
    %537 = vmatpush1.bf16.msra.mxu0 %v472
    %538 = vmatprep.subr.bf16.mxu0 %v477
    %539 = vmatpush1.bf16.msra.mxu0 %v476
    %540 = vmatprep.subr.bf16.mxu0 %v481
    %541 = vmatpush1.bf16.msra.mxu0 %v480
    %542 = vmatprep.subr.bf16.mxu0 %v485
    %543 = vmatpush1.bf16.msra.mxu0 %v484
    %544 = vmatprep.subr.bf16.mxu0 %v489
    %545 = vmatpush1.bf16.msra.mxu0 %v488
    %546 = vmatprep.subr.bf16.mxu0 %v493
    %547 = vmatpush1.bf16.msra.mxu0 %v492
    %548 = vmatprep.subr.bf16.mxu0 %v497
    %549 = vmatpush1.bf16.msra.mxu0 %v496
    %550 = vmatprep.subr.bf16.mxu0 %v501
    %551 = vmatpush1.bf16.msra.mxu0 %v500
    %552 = vmatprep.subr.bf16.mxu0 0
    %553 = vmatpush1.bf16.msra.mxu0 0
    %554 = vmatprep.subr.bf16.mxu0 0
    %555 = vmatpush1.bf16.msra.mxu0 0
    %556 = vmatprep.subr.bf16.mxu0 0
    %557 = vmatpush1.bf16.msra.mxu0 0
    %558 = vmatprep.subr.bf16.mxu0 0
    %559 = vmatpush1.bf16.msra.mxu0 0
    %560 = vmatprep.subr.bf16.mxu0 0
    %561 = vmatpush1.bf16.msra.mxu0 0
    %562 = vmatprep.subr.bf16.mxu0 0
    %563 = vmatpush1.bf16.msra.mxu0 0
    %564 = vmatprep.subr.bf16.mxu0 0
    %565 = vmatpush1.bf16.msra.mxu0 0
    %566 = vmatprep.subr.bf16.mxu0 0
    %567 = vmatpush1.bf16.msra.mxu0 0
    %568 = vmatprep.mubr.bf16.mxu0 0
    %569 = vmatmul.mubr.bf16.gmra.mrb[0].mxu0 %v320
    %v570 = vpop.f32.mrb[0].mxu0
    %v571 = vadd.f32 %v359, %v570
    %v572 = vpop.f32.mrb[0].mxu0
    %v573 = vadd.f32 %v363, %v572
    %v574 = vpop.f32.mrb[0].mxu0
    %v575 = vadd.f32 %v359, %v574
    %v576 = vpop.f32.mrb[0].mxu0
    %v577 = vadd.f32 %v363, %v576
    %578 = vmatprep.mubr.bf16.mxu0 0
    %579 = vmatmul.mubr.bf16.gmra.mrb[0].mxu0 %v321
    %v580 = vpop.f32.mrb[0].mxu0
    %v581 = vadd.f32 %v359, %v580
    %v582 = vpop.f32.mrb[0].mxu0
    %v583 = vadd.f32 %v363, %v582
    %v584 = vpop.f32.mrb[0].mxu0
    %v585 = vadd.f32 %v359, %v584
    %v586 = vpop.f32.mrb[0].mxu0
    %v587 = vadd.f32 %v363, %v586
    %588 = vdwg.mxu0
    %589 = vmatprep.subr.bf16.mxu0 %v475
    %590 = vmatpush1.bf16.msra.mxu0 %v474
    %591 = vmatprep.subr.bf16.mxu0 %v479
    %592 = vmatpush1.bf16.msra.mxu0 %v478
    %593 = vmatprep.subr.bf16.mxu0 %v483
    %594 = vmatpush1.bf16.msra.mxu0 %v482
    %595 = vmatprep.subr.bf16.mxu0 %v487
    %596 = vmatpush1.bf16.msra.mxu0 %v486
    %597 = vmatprep.subr.bf16.mxu0 %v491
    %598 = vmatpush1.bf16.msra.mxu0 %v490
    %599 = vmatprep.subr.bf16.mxu0 %v495
    %600 = vmatpush1.bf16.msra.mxu0 %v494
    %601 = vmatprep.subr.bf16.mxu0 %v499
    %602 = vmatpush1.bf16.msra.mxu0 %v498
    %603 = vmatprep.subr.bf16.mxu0 %v503
    %604 = vmatpush1.bf16.msra.mxu0 %v502
    %605 = vmatprep.subr.bf16.mxu0 0
    %606 = vmatpush1.bf16.msra.mxu0 0
    %607 = vmatprep.subr.bf16.mxu0 0
    %608 = vmatpush1.bf16.msra.mxu0 0
    %609 = vmatprep.subr.bf16.mxu0 0
    %610 = vmatpush1.bf16.msra.mxu0 0
    %611 = vmatprep.subr.bf16.mxu0 0
    %612 = vmatpush1.bf16.msra.mxu0 0
    %613 = vmatprep.subr.bf16.mxu0 0
    %614 = vmatpush1.bf16.msra.mxu0 0
    %615 = vmatprep.subr.bf16.mxu0 0
    %616 = vmatpush1.bf16.msra.mxu0 0
    %617 = vmatprep.subr.bf16.mxu0 0
    %618 = vmatpush1.bf16.msra.mxu0 0
    %619 = vmatprep.subr.bf16.mxu0 0
    %620 = vmatpush1.bf16.msra.mxu0 0
    %621 = vmatprep.mubr.bf16.mxu0 0
    %622 = vmatmul.mubr.bf16.gmra.mrb[0].mxu0 %v320
    %v623 = vpop.f32.mrb[0].mxu0
    %v624 = vadd.f32 %v367, %v623
    %v625 = vpop.f32.mrb[0].mxu0
    %v626 = vadd.f32 %v371, %v625
    %v627 = vpop.f32.mrb[0].mxu0
    %v628 = vadd.f32 %v367, %v627
    %v629 = vpop.f32.mrb[0].mxu0
    %v630 = vadd.f32 %v371, %v629
    %631 = vmatprep.mubr.bf16.mxu0 0
    %632 = vmatmul.mubr.bf16.gmra.mrb[0].mxu0 %v321
    %v633 = vpop.f32.mrb[0].mxu0
    %v634 = vadd.f32 %v367, %v633
    %v635 = vpop.f32.mrb[0].mxu0
    %v636 = vadd.f32 %v371, %v635
    %v637 = vpop.f32.mrb[0].mxu0
    %v638 = vadd.f32 %v367, %v637
    %v639 = vpop.f32.mrb[0].mxu0
    %v640 = vadd.f32 %v371, %v639
    %641 = vdwg.mxu0
    %v642 = vmax.f32 %v571, %v573
    %643 = vmax.xlane.f32.xlu0 %v642
    %v644 = vpop.xlane.xlu0 %643
    %v645 = vmax.f32 %v575, %v577
    %646 = vmax.xlane.f32.xlu0 %v645
    %v647 = vpop.xlane.xlu0 %646
    %v648 = vmax.f32 %v581, %v583
    %649 = vmax.xlane.f32.xlu0 %v648
    %v650 = vpop.xlane.xlu0 %649
    %v651 = vmax.f32 %v585, %v587
    %652 = vmax.xlane.f32.xlu0 %v651
    %v653 = vpop.xlane.xlu0 %652
    %v654 = vsub.f32 %v571, %v644
    %v655 = vsub.f32 %v573, %v644
    %v656 = vsub.f32 %v575, %v647
    %v657 = vsub.f32 %v577, %v647
    %v658 = vsub.f32 %v581, %v650
    %v659 = vsub.f32 %v583, %v650
    %v660 = vsub.f32 %v585, %v653
    %v661 = vsub.f32 %v587, %v653
    %v662 = vmul.f32 %v654, 1.442695
    %v663 = vpow.pop %v662
    %v664 = vmul.f32 %v655, 1.442695
    %v665 = vpow.pop %v664
    %v666 = vmul.f32 %v656, 1.442695
    %v667 = vpow.pop %v666
    %v668 = vmul.f32 %v657, 1.442695
    %v669 = vpow.pop %v668
    %v670 = vmul.f32 %v658, 1.442695
    %v671 = vpow.pop %v670
    %v672 = vmul.f32 %v659, 1.442695
    %v673 = vpow.pop %v672
    %v674 = vmul.f32 %v660, 1.442695
    %v675 = vpow.pop %v674
    %v676 = vmul.f32 %v661, 1.442695
    %v677 = vpow.pop %v676
    %v678 = vadd.f32 %v663, %v665
    %679 = vadd.xlane.f32.xlu0 %v678
    %v680 = vpop.xlane.xlu0 %679
    %v681 = vadd.f32 %v667, %v669
    %682 = vadd.xlane.f32.xlu0 %v681
    %v683 = vpop.xlane.xlu0 %682
    %v684 = vadd.f32 %v671, %v673
    %685 = vadd.xlane.f32.xlu0 %v684
    %v686 = vpop.xlane.xlu0 %685
    %v687 = vadd.f32 %v675, %v677
    %688 = vadd.xlane.f32.xlu0 %v687
    %v689 = vpop.xlane.xlu0 %688
    %v690 = vrcp.pop %v680
    %v691 = vrcp.pop %v683
    %v692 = vrcp.pop %v686
    %v693 = vrcp.pop %v689
    %v694 = vmul.f32 %v663, %v690
    %v695 = vmul.f32 %v665, %v690
    %v696 = vmul.f32 %v667, %v691
    %v697 = vmul.f32 %v669, %v691
    %v698 = vmul.f32 %v671, %v692
    %v699 = vmul.f32 %v673, %v692
    %v700 = vmul.f32 %v675, %v693
    %v701 = vmul.f32 %v677, %v693
    %702 = vst [vmem:[#allocation2] sm:$0xff] %v694
    %703 = vst [vmem:[#allocation2 + $0x8] sm:$0xff] %v695
    %704 = vst [vmem:[#allocation2 + $0x10] sm:$0xff] %v696
    %705 = vst [vmem:[#allocation2 + $0x18] sm:$0xff] %v697
    %706 = vst [vmem:[#allocation2 + $0x20] sm:$0xff] %v698
    %707 = vst [vmem:[#allocation2 + $0x28] sm:$0xff] %v699
    %708 = vst [vmem:[#allocation2 + $0x30] sm:$0xff] %v700
    %709 = vst [vmem:[#allocation2 + $0x38] sm:$0xff] %v701
    %v710 = vpack.c.bf16 %v696, %v694
    %v711 = vpack.c.bf16 %v697, %v695
    %v712 = vpack.c.bf16 %v700, %v698
    %v713 = vpack.c.bf16 %v701, %v699
    %v714 = vld [vmem:[%s8] sm:$0xf]
    %v715 = vld [vmem:[%s8 + $0x4] sm:$0xf]
    %v716 = vld [vmem:[%s8 + $0x8] sm:$0xf]
    %v717 = vld [vmem:[%s8 + $0xc] sm:$0xf]
    %v718 = vld [vmem:[%s8 + $0x10] sm:$0xf]
    %v719 = vld [vmem:[%s8 + $0x14] sm:$0xf]
    %v720 = vld [vmem:[%s8 + $0x18] sm:$0xf]
    %v721 = vld [vmem:[%s8 + $0x1c] sm:$0xf]
    %v722 = vld [vmem:[%s8 + $0x20] sm:$0xf]
    %v723 = vld [vmem:[%s8 + $0x24] sm:$0xf]
    %v724 = vld [vmem:[%s8 + $0x28] sm:$0xf]
    %v725 = vld [vmem:[%s8 + $0x2c] sm:$0xf]
    %v726 = vld [vmem:[%s8 + $0x30] sm:$0xf]
    %v727 = vld [vmem:[%s8 + $0x34] sm:$0xf]
    %v728 = vld [vmem:[%s8 + $0x38] sm:$0xf]
    %v729 = vld [vmem:[%s8 + $0x3c] sm:$0xf]
    %v730 = vld [vmem:[%s8 + $0x40] sm:$0xf]
    %v731 = vld [vmem:[%s8 + $0x44] sm:$0xf]
    %v732 = vld [vmem:[%s8 + $0x48] sm:$0xf]
    %v733 = vld [vmem:[%s8 + $0x4c] sm:$0xf]
    %v734 = vld [vmem:[%s8 + $0x50] sm:$0xf]
    %v735 = vld [vmem:[%s8 + $0x54] sm:$0xf]
    %v736 = vld [vmem:[%s8 + $0x58] sm:$0xf]
    %v737 = vld [vmem:[%s8 + $0x5c] sm:$0xf]
    %v738 = vld [vmem:[%s8 + $0x60] sm:$0xf]
    %v739 = vld [vmem:[%s8 + $0x64] sm:$0xf]
    %v740 = vld [vmem:[%s8 + $0x68] sm:$0xf]
    %v741 = vld [vmem:[%s8 + $0x6c] sm:$0xf]
    %v742 = vld [vmem:[%s8 + $0x70] sm:$0xf]
    %v743 = vld [vmem:[%s8 + $0x74] sm:$0xf]
    %v744 = vld [vmem:[%s8 + $0x78] sm:$0xf]
    %v745 = vld [vmem:[%s8 + $0x7c] sm:$0xf]
    %v778 = vunpack.c.l.b16 %v714
    %v779 = vunpack.c.l.b16 %v715
    %v780 = vunpack.c.l.b16 %v716
    %v781 = vunpack.c.l.b16 %v717
    %v782 = vunpack.c.l.b16 %v718
    %v783 = vunpack.c.l.b16 %v719
    %v784 = vunpack.c.l.b16 %v720
    %v785 = vunpack.c.l.b16 %v721
    %v786 = vunpack.c.l.b16 %v722
    %v787 = vunpack.c.l.b16 %v723
    %v788 = vunpack.c.l.b16 %v724
    %v789 = vunpack.c.l.b16 %v725
    %v790 = vunpack.c.l.b16 %v726
    %v791 = vunpack.c.l.b16 %v727
    %v792 = vunpack.c.l.b16 %v728
    %v793 = vunpack.c.l.b16 %v729
    %v794 = vunpack.c.l.b16 %v730
    %v795 = vunpack.c.l.b16 %v731
    %v796 = vunpack.c.l.b16 %v732
    %v797 = vunpack.c.l.b16 %v733
    %v798 = vunpack.c.l.b16 %v734
    %v799 = vunpack.c.l.b16 %v735
    %v800 = vunpack.c.l.b16 %v736
    %v801 = vunpack.c.l.b16 %v737
    %v802 = vunpack.c.l.b16 %v738
    %v803 = vunpack.c.l.b16 %v739
    %v804 = vunpack.c.l.b16 %v740
    %v805 = vunpack.c.l.b16 %v741
    %v806 = vunpack.c.l.b16 %v742
    %v807 = vunpack.c.l.b16 %v743
    %v808 = vunpack.c.l.b16 %v744
    %v809 = vunpack.c.l.b16 %v745
    %v810 = vpack.c.b16 %v779, %v778
    %v811 = vpack.c.b16 %v781, %v780
    %v812 = vpack.c.b16 %v783, %v782
    %v813 = vpack.c.b16 %v785, %v784
    %v814 = vpack.c.b16 %v787, %v786
    %v815 = vpack.c.b16 %v789, %v788
    %v816 = vpack.c.b16 %v791, %v790
    %v817 = vpack.c.b16 %v793, %v792
    %v818 = vpack.c.b16 %v795, %v794
    %v819 = vpack.c.b16 %v797, %v796
    %v820 = vpack.c.b16 %v799, %v798
    %v821 = vpack.c.b16 %v801, %v800
    %v822 = vpack.c.b16 %v803, %v802
    %v823 = vpack.c.b16 %v805, %v804
    %v824 = vpack.c.b16 %v807, %v806
    %v825 = vpack.c.b16 %v809, %v808
    %842 = vmatprep.subr.bf16.mxu0 0
    %843 = vmatpush1.bf16.msra.mxu0 %v810
    %844 = vmatprep.subr.bf16.mxu0 0
    %845 = vmatpush1.bf16.msra.mxu0 %v811
    %846 = vmatprep.subr.bf16.mxu0 0
    %847 = vmatpush1.bf16.msra.mxu0 %v812
    %848 = vmatprep.subr.bf16.mxu0 0
    %849 = vmatpush1.bf16.msra.mxu0 %v813
    %850 = vmatprep.subr.bf16.mxu0 0
    %851 = vmatpush1.bf16.msra.mxu0 %v814
    %852 = vmatprep.subr.bf16.mxu0 0
    %853 = vmatpush1.bf16.msra.mxu0 %v815
    %854 = vmatprep.subr.bf16.mxu0 0
    %855 = vmatpush1.bf16.msra.mxu0 %v816
    %856 = vmatprep.subr.bf16.mxu0 0
    %857 = vmatpush1.bf16.msra.mxu0 %v817
    %858 = vmatprep.subr.bf16.mxu0 0
    %859 = vmatpush1.bf16.msra.mxu0 %v818
    %860 = vmatprep.subr.bf16.mxu0 0
    %861 = vmatpush1.bf16.msra.mxu0 %v819
    %862 = vmatprep.subr.bf16.mxu0 0
    %863 = vmatpush1.bf16.msra.mxu0 %v820
    %864 = vmatprep.subr.bf16.mxu0 0
    %865 = vmatpush1.bf16.msra.mxu0 %v821
    %866 = vmatprep.subr.bf16.mxu0 0
    %867 = vmatpush1.bf16.msra.mxu0 %v822
    %868 = vmatprep.subr.bf16.mxu0 0
    %869 = vmatpush1.bf16.msra.mxu0 %v823
    %870 = vmatprep.subr.bf16.mxu0 0
    %871 = vmatpush1.bf16.msra.mxu0 %v824
    %872 = vmatprep.subr.bf16.mxu0 0
    %873 = vmatpush1.bf16.msra.mxu0 %v825
    %874 = vmatprep.mubr.bf16.mxu0 %v711
    %875 = vmatmul.mubr.bf16.gmra.mrb[0].mxu0 %v710
    %v876 = vpop.f32.mrb[0].mxu0
    %v877 = vadd.f32 0.0, %v876
    %v878 = vpop.f32.mrb[0].mxu0
    %v879 = vpop.f32.mrb[0].mxu0
    %v880 = vadd.f32 0.0, %v879
    %v881 = vpop.f32.mrb[0].mxu0
    %882 = vmatprep.mubr.bf16.mxu0 %v713
    %883 = vmatmul.mubr.bf16.gmra.mrb[0].mxu0 %v712
    %v884 = vpop.f32.mrb[0].mxu0
    %v885 = vadd.f32 0.0, %v884
    %v886 = vpop.f32.mrb[0].mxu0
    %v887 = vpop.f32.mrb[0].mxu0
    %v888 = vadd.f32 0.0, %v887
    %v889 = vpop.f32.mrb[0].mxu0
    %890 = vdwg.mxu0
    %v891 = vsub.f32 %v48, %v877
    %v892 = vsub.f32 %v49, %v880
    %v893 = vsub.f32 %v50, %v885
    %v894 = vsub.f32 %v51, %v888
    %v895 = vmul.f32 %v891, %v891
    %v896 = vmul.f32 %v892, %v892
    %v897 = vmul.f32 %v893, %v893
    %v898 = vmul.f32 %v894, %v894
    %899 = vadd.xlane.f32.xlu0 %v895
    %v900 = vpop.xlane.xlu0 %899
    %901 = vadd.xlane.f32.xlu0 %v896
    %v902 = vpop.xlane.xlu0 %901
    %903 = vadd.xlane.f32.xlu0 %v897
    %v904 = vpop.xlane.xlu0 %903
    %905 = vadd.xlane.f32.xlu0 %v898
    %v906 = vpop.xlane.xlu0 %905
    %v907 = vadd.f32 %v624, 1.0
    %v908 = vadd.f32 %v626, 1.0
    %v909 = vadd.f32 %v628, 1.0
    %v910 = vadd.f32 %v630, 1.0
    %v911 = vadd.f32 %v634, 1.0
    %v912 = vadd.f32 %v636, 1.0
    %v913 = vadd.f32 %v638, 1.0
    %v914 = vadd.f32 %v640, 1.0
    %v915 = vmul.f32 %v571, %v571
    %v916 = vmul.f32 %v573, %v573
    %v917 = vmul.f32 %v575, %v575
    %v918 = vmul.f32 %v577, %v577
    %v919 = vmul.f32 %v581, %v581
    %v920 = vmul.f32 %v583, %v583
    %v921 = vmul.f32 %v585, %v585
    %v922 = vmul.f32 %v587, %v587
    %v923 = vsub.f32 %v907, %v915
    %v924 = vsub.f32 %v908, %v916
    %v925 = vsub.f32 %v909, %v917
    %v926 = vsub.f32 %v910, %v918
    %v927 = vsub.f32 %v911, %v919
    %v928 = vsub.f32 %v912, %v920
    %v929 = vsub.f32 %v913, %v921
    %v930 = vsub.f32 %v914, %v922
    %v931 = vmul.f32 %v624, 1.442695
    %v932 = vpow.pop %v931
    %v933 = vmul.f32 %v626, 1.442695
    %v934 = vpow.pop %v933
    %v935 = vmul.f32 %v628, 1.442695
    %v936 = vpow.pop %v935
    %v937 = vmul.f32 %v630, 1.442695
    %v938 = vpow.pop %v937
    %v939 = vmul.f32 %v634, 1.442695
    %v940 = vpow.pop %v939
    %v941 = vmul.f32 %v636, 1.442695
    %v942 = vpow.pop %v941
    %v943 = vmul.f32 %v638, 1.442695
    %v944 = vpow.pop %v943
    %v945 = vmul.f32 %v640, 1.442695
    %v946 = vpow.pop %v945
    %v947 = vsub.f32 %v923, %v932
    %v948 = vsub.f32 %v924, %v934
    %v949 = vsub.f32 %v925, %v936
    %v950 = vsub.f32 %v926, %v938
    %v951 = vsub.f32 %v927, %v940
    %v952 = vsub.f32 %v928, %v942
    %v953 = vsub.f32 %v929, %v944
    %v954 = vsub.f32 %v930, %v946
    %v955 = vadd.f32 %v947, %v948
    %956 = vadd.xlane.f32.xlu0 %v955
    %v957 = vpop.xlane.xlu0 %956
    %v958 = vadd.f32 %v949, %v950
    %959 = vadd.xlane.f32.xlu0 %v958
    %v960 = vpop.xlane.xlu0 %959
    %v961 = vadd.f32 %v951, %v952
    %962 = vadd.xlane.f32.xlu0 %v961
    %v963 = vpop.xlane.xlu0 %962
    %v964 = vadd.f32 %v953, %v954
    %965 = vadd.xlane.f32.xlu0 %v964
    %v966 = vpop.xlane.xlu0 %965
    %v967 = vmul.f32 %v957, -0.5
    %v968 = vmul.f32 %v960, -0.5
    %v969 = vmul.f32 %v963, -0.5
    %v970 = vmul.f32 %v966, -0.5
    %v971 = vlaneseq
    %v972 = vand.u32 %v971, 127
    %vm973 = vcmp.eq.s32.totalorder %v972, 0
    %vm974 = vcmp.eq.s32.totalorder %v972, 1
    %v975 = vsel %vm974, %v967, 0.0
    %v976 = vsel %vm974, %v968, 0.0
    %v977 = vsel %vm974, %v969, 0.0
    %v978 = vsel %vm974, %v970, 0.0
    %v979 = vsel %vm973, %v900, %v975
    %v980 = vsel %vm973, %v902, %v976
    %v981 = vsel %vm973, %v904, %v977
    %v982 = vsel %vm973, %v906, %v978
    %983 = vst [vmem:[%s10] sm:$0xff] %v979
    %984 = vst [vmem:[%s10 + $0x8] sm:$0xff] %v980
    %985 = vst [vmem:[%s10 + $0x10] sm:$0xff] %v981
    %986 = vst [vmem:[%s10 + $0x18] sm:$0xff] %v982
    // Predicated region
    $region38: #{policy_forward.1} parent=1 // pred_check
      _
    $region39: #{policy_forward.1} parent=1 // pred_check_branch
      %988 = sbr.rel (0) target = $region41
    $region40: #{policy_forward.1} parent=1 // pred_region
      %s990 = ssub.s32 1024, 1024
      %991 = vsyncadd [#allocation3], %s990
      %s992 = sshll.u32 [#allocation2], 4
      %s993 = int_to_ptr.vmem [resolvable:$true] %s992
      %998 = dma.vmem_to_hbm [thread:$0]  %s993, 1024, %s9, [#allocation3], 256, 256, 16
    $region41: #{policy_forward.1} parent=1 // pred_fallthru
      _
    // Predicated region
    $region42: #{policy_forward.1} parent=1 // pred_check
      _
    $region43: #{policy_forward.1} parent=1 // pred_check_branch
      %1000 = sbr.rel (0) target = $region45
    $region44: #{policy_forward.1} parent=1 // pred_region
      _
    $region45: #{policy_forward.1} parent=1 // pred_fallthru
      _
    // Predicated region
    $region46: #{policy_forward.1} parent=1 // pred_check
      _
    $region47: #{policy_forward.1} parent=1 // pred_check_branch
      %1002 = sbr.rel (0) target = $region49
    $region48: #{policy_forward.1} parent=1 // pred_region
      %1003 = dma.done [#allocation3], 1024
    $region49: #{policy_forward.1} parent=1 // pred_fallthru
      _
    // Predicated region
    $region50: #{policy_forward.1} parent=1 // pred_check
      _
    $region51: #{policy_forward.1} parent=1 // pred_check_branch
      %1005 = sbr.rel (0) target = $region53
    $region52: #{policy_forward.1} parent=1 // pred_region
      _
    $region53: #{policy_forward.1} parent=1 // pred_fallthru
      _
    %1006 = vsyncpa [#allocation3], 1

</llo_original>
